<compile_context>
chip_gen: v7x
topology: tpu7x:2x2x1
jax: 0.10.0
libtpu: 0.0.40
codegen_flags: <defaults>
</compile_context>

<pallas_src>
import functools

import jax
import jax.numpy as jnp
import numpy as np
from jax.experimental import pallas as pl
from jax.experimental.pallas import tpu as pltpu

BN_EPS = 1e-5


# ----------------------------------------------------------------------------
# Fused Pallas kernel: all heads, all conv layers, one batch element per grid step
# ----------------------------------------------------------------------------
def _fused_heads_kernel(*refs, K, L, pad, Cin, Ch, F, head_meta):
    # refs layout:
    #   refs[0]                : x      (L, Cin)  bf16
    #   refs[1 : 1+n_w]        : packed weight/shift refs (see pack_params for order)
    #   refs[1+n_w]            : out    (L, total_out) f32
    #   refs[2+n_w]            : xpad   (L+2*pad, max(Cin,Ch)) f32 VMEM scratch
    n_w = (2 if F > 0 else 0)
    for (num_conv, _, _) in head_meta:
        n_w += 2 * (max(num_conv - 2, 0) + 1)

    x_ref = refs[0]
    wrefs = refs[1:1 + n_w]
    out_ref = refs[1 + n_w]
    xpad = refs[2 + n_w]

    # Zero the padded-activation scratch once; pad rows stay zero across all layers.
    xpad[...] = jnp.zeros_like(xpad)

    def conv(h_f32, c, w_ref, shift_ref, relu):
        # h_f32: (L, c) f32 value.  Write it into the padded scratch, build the
        # (L, K*c) im2col window matrix, and do ONE bf16 MXU matmul.
        xpad[pad:pad + L, 0:c] = h_f32
        cols = [xpad[t:t + L, 0:c] for t in range(K)]
        win = jnp.concatenate(cols, axis=1).astype(jnp.bfloat16)      # (L, K*c)
        y = jnp.dot(win, w_ref[...], preferred_element_type=jnp.float32)
        y = y + shift_ref[...]
        if relu:
            y = jnp.maximum(y, 0.0)
        return y                                                       # (L, cout) f32

    x_f32 = x_ref[...].astype(jnp.float32)

    idx = 0
    first = None
    if F > 0:
        # Stacked first intermediate conv of all heads: one matmul, Cout = F.
        w0, s0 = wrefs[0], wrefs[1]
        idx = 2
        first = conv(x_f32, Cin, w0, s0, relu=True)                    # (L, F)

    outs = []
    for (num_conv, cout, first_off) in head_meta:
        if num_conv >= 2:
            h = first[:, first_off:first_off + Ch]
            c_in = Ch
        else:
            h = x_f32
            c_in = Cin
        for _ in range(max(num_conv - 2, 0)):                          # extra intermediate convs
            w, s = wrefs[idx], wrefs[idx + 1]
            idx += 2
            h = conv(h, Ch, w, s, relu=True)
            c_in = Ch
        wf, bf = wrefs[idx], wrefs[idx + 1]                            # final conv (bias, no ReLU)
        idx += 2
        outs.append(conv(h, c_in, wf, bf, relu=False))

    # Single lane-concatenated store of all head outputs.
    out_ref[...] = jnp.concatenate(outs, axis=1).astype(out_ref.dtype)


# ----------------------------------------------------------------------------
# Parameter construction (PyTorch layout) and one-time packing for the kernel
# ----------------------------------------------------------------------------
def init_separate_head_params(key, input_channels, head_channels, kernel_size,
                              sep_head_dict, init_bias=-2.19):
    """Deterministic synthetic parameters mirroring the PyTorch module's shapes."""
    params = {}
    for cur_name, cfg in sep_head_dict.items():
        out_channels = cfg['out_channels']
        num_conv = cfg['num_conv']
        layers = []
        for _ in range(num_conv - 1):
            key, wk = jax.random.split(key)
            w = jax.random.normal(wk, (head_channels, input_channels, kernel_size),
                                  jnp.float32) * 0.1                   # [Cout, Cin, K]
            gamma = jnp.ones((head_channels,), jnp.float32)
            beta = jnp.zeros((head_channels,), jnp.float32)
            mean = jnp.zeros((head_channels,), jnp.float32)
            var = jnp.ones((head_channels,), jnp.float32)
            scale = gamma / jnp.sqrt(var + BN_EPS)
            shift = beta - mean * scale
            layers.append(dict(w=w, scale=scale, shift=shift, relu=True))
        key, wk, bk = jax.random.split(key, 3)
        w = jax.random.normal(wk, (out_channels, head_channels, kernel_size),
                              jnp.float32) * 0.1
        if 'hm' in cur_name:
            b = jnp.full((out_channels,), init_bias, jnp.float32)
        else:
            b = jax.random.normal(bk, (out_channels,), jnp.float32) * 0.01
        layers.append(dict(w=w, scale=jnp.ones((out_channels,), jnp.float32),
                           shift=b, relu=False))
        params[cur_name] = layers
    return params


def pack_params(params):
    """Fold BN scale into conv weights, reshape to [K*Cin, Cout] bf16, stack the first
    intermediate layer across heads, and record the static head layout."""
    names = list(params.keys())
    any_final = params[names[0]][-1]
    K = any_final['w'].shape[2]
    Ch = any_final['w'].shape[1]            # head_channels
    Cin = Ch
    for name in names:
        if len(params[name]) >= 2:
            Cin = params[name][0]['w'].shape[1]
            break
    # TODO(synk): even kernel_size changes L every layer; fused kernel supports odd K only.
    assert K % 2 == 1, "fused kernel supports odd kernel_size only"

    def fold(layer):
        w = layer['w'] * layer['scale'][:, None, None]                 # fold BN scale
        k, ci, co = w.shape[2], w.shape[1], w.shape[0]
        w2 = jnp.transpose(w, (2, 1, 0)).reshape(k * ci, co).astype(jnp.bfloat16)
        s2 = layer['shift'].reshape(1, co).astype(jnp.float32)
        return w2, s2

    inputs = []
    # Stacked first intermediate layer (heads with num_conv >= 2).
    first_ws, first_ss, first_offs = [], [], {}
    off = 0
    for name in names:
        if len(params[name]) >= 2:
            w2, s2 = fold(params[name][0])
            first_ws.append(w2)
            first_ss.append(s2)
            first_offs[name] = off
            off += w2.shape[1]
        else:
            first_offs[name] = -1
    F = off
    if F > 0:
        inputs.append(jnp.concatenate(first_ws, axis=1))
        inputs.append(jnp.concatenate(first_ss, axis=1))

    head_meta = []
    out_channels = {}
    total_out = 0
    for name in names:
        layers = params[name]
        num_conv = len(layers)
        for layer in layers[1:-1]:                                     # extra intermediate convs
            w2, s2 = fold(layer)
            inputs.extend([w2, s2])
        w2, s2 = fold(layers[-1])                                      # final conv (bias)
        inputs.extend([w2, s2])
        cout = w2.shape[1]
        out_channels[name] = cout
        total_out += cout
        head_meta.append((num_conv, cout, first_offs[name]))

    meta = dict(names=names, K=K, Cin=Cin, Ch=Ch, F=F,
                head_meta=tuple(head_meta), total_out=total_out,
                out_channels=out_channels)
    return dict(inputs=inputs, meta=meta)


# ----------------------------------------------------------------------------
# Forward: one pallas_call for everything
# ----------------------------------------------------------------------------
def _const_spec(shape):
    ndim = len(shape)
    return pl.BlockSpec(shape, lambda b: (0,) * ndim)


def separate_head_forward(packed, x_ncl):
    """x_ncl: [B, C, L] (PyTorch NCL). Returns dict of [B, out_channels, L] arrays."""
    meta = packed['meta']
    K, Cin, Ch, F = meta['K'], meta['Cin'], meta['Ch'], meta['F']
    head_meta, total_out = meta['head_meta'], meta['total_out']
    pad = K // 2

    B, Cx, L = x_ncl.shape
    assert Cx == Cin, (Cx, Cin)
    Lp = L + 2 * pad
    Cmax = max(Cin, Ch)

    x_nlc = jnp.transpose(x_ncl, (0, 2, 1)).astype(jnp.bfloat16)       # [B, L, Cin] bf16

    kernel = functools.partial(_fused_heads_kernel, K=K, L=L, pad=pad,
                               Cin=Cin, Ch=Ch, F=F, head_meta=head_meta)

    in_specs = [pl.BlockSpec((pl.Squeezed(), L, Cin), lambda b: (b, 0, 0))]
    in_specs += [_const_spec(a.shape) for a in packed['inputs']]

    # Cost estimate for XLA's scheduler.
    flops = 0
    for (num_conv, cout, _) in head_meta:
        if num_conv >= 2:
            flops += 2 * B * L * K * Cin * Ch
            flops += 2 * B * L * K * Ch * Ch * max(num_conv - 2, 0)
            flops += 2 * B * L * K * Ch * cout
        else:
            flops += 2 * B * L * K * Ch * cout
    bytes_accessed = (x_nlc.size * x_nlc.dtype.itemsize
                      + sum(a.size * a.dtype.itemsize for a in packed['inputs'])
                      + B * L * total_out * 4)

    out = pl.pallas_call(
        kernel,
        out_shape=jax.ShapeDtypeStruct((B, L, total_out), jnp.float32),
        grid_spec=pltpu.PrefetchScalarGridSpec(
            num_scalar_prefetch=0,
            grid=(B,),
            in_specs=in_specs,
            out_specs=pl.BlockSpec((pl.Squeezed(), L, total_out), lambda b: (b, 0, 0)),
            scratch_shapes=[pltpu.VMEM((Lp, Cmax), jnp.float32)],
        ),
        compiler_params=pltpu.CompilerParams(dimension_semantics=("parallel",)),
        cost_estimate=pl.CostEstimate(flops=flops, transcendentals=0,
                                      bytes_accessed=bytes_accessed),
    )(x_nlc, *packed['inputs'])

    out_ncl = jnp.transpose(out, (0, 2, 1))                            # [B, total_out, L]
    ret, off = {}, 0
    for name in meta['names']:
        c = meta['out_channels'][name]
        ret[name] = out_ncl[:, off:off + c, :]
        off += c
    return ret


# ----------------------------------------------------------------------------
# Pure-JAX f32 reference (lax.conv) for validation
# ----------------------------------------------------------------------------
def reference_forward(params, x_ncl):
    ret = {}
    for name, layers in params.items():
        h = x_ncl
        for layer in layers:
            w = layer['w']                                             # [Cout, Cin, K]
            pad = w.shape[-1] // 2
            y = jax.lax.conv_general_dilated(
                h, w, window_strides=(1,), padding=[(pad, pad)],
                dimension_numbers=('NCH', 'OIH', 'NCH'))
            y = y * layer['scale'][None, :, None] + layer['shift'][None, :, None]
            if layer['relu']:
                y = jnp.maximum(y, 0.0)
            h = y
        ret[name] = h
    return ret


if __name__ == "__main__":
    # Small config consistent with TransFusion usage (input_channels == head_channels).
    B, L = 2, 16
    input_channels = 32
    head_channels = 32
    kernel_size = 3
    sep_head_dict = {
        'center': {'out_channels': 2, 'num_conv': 2},
        'height': {'out_channels': 1, 'num_conv': 3},
        'hm':     {'out_channels': 3, 'num_conv': 2},   # exercises the init_bias branch
    }

    key = jax.random.PRNGKey(0)
    key, xk = jax.random.split(key)
    x = jax.random.normal(xk, (B, input_channels, L), jnp.float32)     # PyTorch NCL input

    params = init_separate_head_params(key, input_channels, head_channels,
                                       kernel_size, sep_head_dict)
    packed = pack_params(params)                                       # one-time packing

    out = separate_head_forward(packed, x)
    out = jax.tree_util.tree_map(jax.block_until_ready, out)

    ref = reference_forward(params, x)
    for name in sep_head_dict:
        assert out[name].shape == (B, sep_head_dict[name]['out_channels'], L), out[name].shape
        # Tolerance loosened vs f32 reference because matmul inputs are bf16 on the MXU.
        np.testing.assert_allclose(np.asarray(out[name]), np.asarray(ref[name]),
                                   rtol=5e-2, atol=5e-2)

    print("KERNEL_OK")
</pallas_src>

<mosaic_0001>
module attributes {stable_mosaic.version = 11 : i64} {
  func.func @_fused_heads_kernel(%arg0: i32, %arg1: memref<1x16x32xbf16, #tpu.memory_space<vmem>>, %arg2: memref<96x96xbf16, #tpu.memory_space<vmem>>, %arg3: memref<1x96xf32, #tpu.memory_space<vmem>>, %arg4: memref<96x2xbf16, #tpu.memory_space<vmem>>, %arg5: memref<1x2xf32, #tpu.memory_space<vmem>>, %arg6: memref<96x32xbf16, #tpu.memory_space<vmem>>, %arg7: memref<1x32xf32, #tpu.memory_space<vmem>>, %arg8: memref<96x1xbf16, #tpu.memory_space<vmem>>, %arg9: memref<1x1xf32, #tpu.memory_space<vmem>>, %arg10: memref<96x3xbf16, #tpu.memory_space<vmem>>, %arg11: memref<1x3xf32, #tpu.memory_space<vmem>>, %arg12: memref<1x16x6xf32, #tpu.memory_space<vmem>>, %arg13: memref<18x32xf32, #tpu.memory_space<vmem>>) attributes {dimension_semantics = [#tpu.dimension_semantics<parallel>], iteration_bounds = array<i64: 2>, scalar_prefetch = 0 : i64, scratch_operands = 1 : i64, tpu.core_type = #tpu.core_type<tc>, window_params = [{transform_indices = @transform_0, window_bounds = array<i64: 1, 16, 32>}, {pipeline_mode = #tpu.pipeline_mode<synchronous>, transform_indices = @transform_1, window_bounds = array<i64: 96, 96>}, {pipeline_mode = #tpu.pipeline_mode<synchronous>, transform_indices = @transform_2, window_bounds = array<i64: 1, 96>}, {pipeline_mode = #tpu.pipeline_mode<synchronous>, transform_indices = @transform_3, window_bounds = array<i64: 96, 2>}, {pipeline_mode = #tpu.pipeline_mode<synchronous>, transform_indices = @transform_4, window_bounds = array<i64: 1, 2>}, {pipeline_mode = #tpu.pipeline_mode<synchronous>, transform_indices = @transform_5, window_bounds = array<i64: 96, 32>}, {pipeline_mode = #tpu.pipeline_mode<synchronous>, transform_indices = @transform_6, window_bounds = array<i64: 1, 32>}, {pipeline_mode = #tpu.pipeline_mode<synchronous>, transform_indices = @transform_7, window_bounds = array<i64: 96, 1>}, {pipeline_mode = #tpu.pipeline_mode<synchronous>, transform_indices = @transform_8, window_bounds = array<i64: 1, 1>}, {pipeline_mode = #tpu.pipeline_mode<synchronous>, transform_indices = @transform_9, window_bounds = array<i64: 96, 3>}, {pipeline_mode = #tpu.pipeline_mode<synchronous>, transform_indices = @transform_10, window_bounds = array<i64: 1, 3>}, {transform_indices = @transform_11, window_bounds = array<i64: 1, 16, 6>}]} {
    %cst = arith.constant 0.000000e+00 : f32
    %0 = vector.broadcast %cst : f32 to vector<18x32xf32>
    %c0 = arith.constant 0 : index
    %c0_0 = arith.constant 0 : index
    %1 = vector.load %arg13[%c0, %c0_0] : memref<18x32xf32, #tpu.memory_space<vmem>>, vector<18x32xf32>
    tpu.vector_store %arg13[%c0, %c0_0], %0 {strides = array<i32>} : memref<18x32xf32, #tpu.memory_space<vmem>>, vector<18x32xf32>,
    %c0_1 = arith.constant 0 : index
    %c0_2 = arith.constant 0 : index
    %c0_3 = arith.constant 0 : index
    %2 = vector.load %arg1[%c0_1, %c0_2, %c0_3] : memref<1x16x32xbf16, #tpu.memory_space<vmem>>, vector<1x16x32xbf16>
    %3 = vector.shape_cast %2 : vector<1x16x32xbf16> to vector<16x32xbf16>
    %4 = arith.extf %3 : vector<16x32xbf16> to vector<16x32xf32>
    %c1 = arith.constant 1 : index
    %c0_4 = arith.constant 0 : index
    %5 = vector.load %arg13[%c1, %c0_4] : memref<18x32xf32, #tpu.memory_space<vmem>>, vector<16x32xf32>
    tpu.vector_store %arg13[%c1, %c0_4], %4 {strides = array<i32>} : memref<18x32xf32, #tpu.memory_space<vmem>>, vector<16x32xf32>,
    %c0_5 = arith.constant 0 : index
    %c0_6 = arith.constant 0 : index
    %6 = vector.load %arg13[%c0_5, %c0_6] : memref<18x32xf32, #tpu.memory_space<vmem>>, vector<16x32xf32>
    %c1_7 = arith.constant 1 : index
    %c0_8 = arith.constant 0 : index
    %7 = vector.load %arg13[%c1_7, %c0_8] : memref<18x32xf32, #tpu.memory_space<vmem>>, vector<16x32xf32>
    %c2 = arith.constant 2 : index
    %c0_9 = arith.constant 0 : index
    %8 = vector.load %arg13[%c2, %c0_9] : memref<18x32xf32, #tpu.memory_space<vmem>>, vector<16x32xf32>
    %9 = tpu.concatenate %6, %7, %8 in 1 : vector<16x32xf32>, vector<16x32xf32>, vector<16x32xf32> -> vector<16x96xf32>
    %10 = arith.truncf %9 : vector<16x96xf32> to vector<16x96xbf16>
    %c0_10 = arith.constant 0 : index
    %c0_11 = arith.constant 0 : index
    %11 = vector.load %arg2[%c0_10, %c0_11] : memref<96x96xbf16, #tpu.memory_space<vmem>>, vector<96x96xbf16>
    %cst_12 = arith.constant dense<0.000000e+00> : vector<16x96xf32>
    %12 = tpu.matmul %10, %11, %cst_12 {dimension_numbers = #tpu.dot_dimension_numbers<[1], [0], [0], [1], [0, 0, 1, 1], [], []>} : vector<16x96xbf16>, vector<96x96xbf16>, vector<16x96xf32> -> vector<16x96xf32>
    %c0_13 = arith.constant 0 : index
    %c0_14 = arith.constant 0 : index
    %13 = vector.load %arg3[%c0_13, %c0_14] : memref<1x96xf32, #tpu.memory_space<vmem>>, vector<1x96xf32>
    %14 = vector.broadcast %13 : vector<1x96xf32> to vector<16x96xf32>
    %15 = arith.addf %12, %14 : vector<16x96xf32>
    %cst_15 = arith.constant 0.000000e+00 : f32
    %16 = vector.broadcast %cst_15 : f32 to vector<16x96xf32>
    %17 = arith.maximumf %15, %16 : vector<16x96xf32>
    %18 = vector.extract_strided_slice %17 {offsets = [0, 0], sizes = [16, 32], strides = [1, 1]} : vector<16x96xf32> to vector<16x32xf32>
    %c1_16 = arith.constant 1 : index
    %c0_17 = arith.constant 0 : index
    %19 = vector.load %arg13[%c1_16, %c0_17] : memref<18x32xf32, #tpu.memory_space<vmem>>, vector<16x32xf32>
    tpu.vector_store %arg13[%c1_16, %c0_17], %18 {strides = array<i32>} : memref<18x32xf32, #tpu.memory_space<vmem>>, vector<16x32xf32>,
    %c0_18 = arith.constant 0 : index
    %c0_19 = arith.constant 0 : index
    %20 = vector.load %arg13[%c0_18, %c0_19] : memref<18x32xf32, #tpu.memory_space<vmem>>, vector<16x32xf32>
    %c1_20 = arith.constant 1 : index
    %c0_21 = arith.constant 0 : index
    %21 = vector.load %arg13[%c1_20, %c0_21] : memref<18x32xf32, #tpu.memory_space<vmem>>, vector<16x32xf32>
    %c2_22 = arith.constant 2 : index
    %c0_23 = arith.constant 0 : index
    %22 = vector.load %arg13[%c2_22, %c0_23] : memref<18x32xf32, #tpu.memory_space<vmem>>, vector<16x32xf32>
    %23 = tpu.concatenate %20, %21, %22 in 1 : vector<16x32xf32>, vector<16x32xf32>, vector<16x32xf32> -> vector<16x96xf32>
    %24 = arith.truncf %23 : vector<16x96xf32> to vector<16x96xbf16>
    %c0_24 = arith.constant 0 : index
    %c0_25 = arith.constant 0 : index
    %25 = vector.load %arg4[%c0_24, %c0_25] : memref<96x2xbf16, #tpu.memory_space<vmem>>, vector<96x2xbf16>
    %cst_26 = arith.constant dense<0.000000e+00> : vector<16x2xf32>
    %26 = tpu.matmul %24, %25, %cst_26 {dimension_numbers = #tpu.dot_dimension_numbers<[1], [0], [0], [1], [0, 0, 1, 1], [], []>} : vector<16x96xbf16>, vector<96x2xbf16>, vector<16x2xf32> -> vector<16x2xf32>
    %c0_27 = arith.constant 0 : index
    %c0_28 = arith.constant 0 : index
    %27 = vector.load %arg5[%c0_27, %c0_28] : memref<1x2xf32, #tpu.memory_space<vmem>>, vector<1x2xf32>
    %28 = vector.broadcast %27 : vector<1x2xf32> to vector<16x2xf32>
    %29 = arith.addf %26, %28 : vector<16x2xf32>
    %30 = vector.extract_strided_slice %17 {offsets = [0, 32], sizes = [16, 32], strides = [1, 1]} : vector<16x96xf32> to vector<16x32xf32>
    %c1_29 = arith.constant 1 : index
    %c0_30 = arith.constant 0 : index
    %31 = vector.load %arg13[%c1_29, %c0_30] : memref<18x32xf32, #tpu.memory_space<vmem>>, vector<16x32xf32>
    tpu.vector_store %arg13[%c1_29, %c0_30], %30 {strides = array<i32>} : memref<18x32xf32, #tpu.memory_space<vmem>>, vector<16x32xf32>,
    %c0_31 = arith.constant 0 : index
    %c0_32 = arith.constant 0 : index
    %32 = vector.load %arg13[%c0_31, %c0_32] : memref<18x32xf32, #tpu.memory_space<vmem>>, vector<16x32xf32>
    %c1_33 = arith.constant 1 : index
    %c0_34 = arith.constant 0 : index
    %33 = vector.load %arg13[%c1_33, %c0_34] : memref<18x32xf32, #tpu.memory_space<vmem>>, vector<16x32xf32>
    %c2_35 = arith.constant 2 : index
    %c0_36 = arith.constant 0 : index
    %34 = vector.load %arg13[%c2_35, %c0_36] : memref<18x32xf32, #tpu.memory_space<vmem>>, vector<16x32xf32>
    %35 = tpu.concatenate %32, %33, %34 in 1 : vector<16x32xf32>, vector<16x32xf32>, vector<16x32xf32> -> vector<16x96xf32>
    %36 = arith.truncf %35 : vector<16x96xf32> to vector<16x96xbf16>
    %c0_37 = arith.constant 0 : index
    %c0_38 = arith.constant 0 : index
    %37 = vector.load %arg6[%c0_37, %c0_38] : memref<96x32xbf16, #tpu.memory_space<vmem>>, vector<96x32xbf16>
    %cst_39 = arith.constant dense<0.000000e+00> : vector<16x32xf32>
    %38 = tpu.matmul %36, %37, %cst_39 {dimension_numbers = #tpu.dot_dimension_numbers<[1], [0], [0], [1], [0, 0, 1, 1], [], []>} : vector<16x96xbf16>, vector<96x32xbf16>, vector<16x32xf32> -> vector<16x32xf32>
    %c0_40 = arith.constant 0 : index
    %c0_41 = arith.constant 0 : index
    %39 = vector.load %arg7[%c0_40, %c0_41] : memref<1x32xf32, #tpu.memory_space<vmem>>, vector<1x32xf32>
    %40 = vector.broadcast %39 : vector<1x32xf32> to vector<16x32xf32>
    %41 = arith.addf %38, %40 : vector<16x32xf32>
    %cst_42 = arith.constant 0.000000e+00 : f32
    %42 = vector.broadcast %cst_42 : f32 to vector<16x32xf32>
    %43 = arith.maximumf %41, %42 : vector<16x32xf32>
    %c1_43 = arith.constant 1 : index
    %c0_44 = arith.constant 0 : index
    %44 = vector.load %arg13[%c1_43, %c0_44] : memref<18x32xf32, #tpu.memory_space<vmem>>, vector<16x32xf32>
    tpu.vector_store %arg13[%c1_43, %c0_44], %43 {strides = array<i32>} : memref<18x32xf32, #tpu.memory_space<vmem>>, vector<16x32xf32>,
    %c0_45 = arith.constant 0 : index
    %c0_46 = arith.constant 0 : index
    %45 = vector.load %arg13[%c0_45, %c0_46] : memref<18x32xf32, #tpu.memory_space<vmem>>, vector<16x32xf32>
    %c1_47 = arith.constant 1 : index
    %c0_48 = arith.constant 0 : index
    %46 = vector.load %arg13[%c1_47, %c0_48] : memref<18x32xf32, #tpu.memory_space<vmem>>, vector<16x32xf32>
    %c2_49 = arith.constant 2 : index
    %c0_50 = arith.constant 0 : index
    %47 = vector.load %arg13[%c2_49, %c0_50] : memref<18x32xf32, #tpu.memory_space<vmem>>, vector<16x32xf32>
    %48 = tpu.concatenate %45, %46, %47 in 1 : vector<16x32xf32>, vector<16x32xf32>, vector<16x32xf32> -> vector<16x96xf32>
    %49 = arith.truncf %48 : vector<16x96xf32> to vector<16x96xbf16>
    %c0_51 = arith.constant 0 : index
    %c0_52 = arith.constant 0 : index
    %50 = vector.load %arg8[%c0_51, %c0_52] : memref<96x1xbf16, #tpu.memory_space<vmem>>, vector<96x1xbf16>
    %cst_53 = arith.constant dense<0.000000e+00> : vector<16x1xf32>
    %51 = tpu.matmul %49, %50, %cst_53 {dimension_numbers = #tpu.dot_dimension_numbers<[1], [0], [0], [1], [0, 0, 1, 1], [], []>} : vector<16x96xbf16>, vector<96x1xbf16>, vector<16x1xf32> -> vector<16x1xf32>
    %c0_54 = arith.constant 0 : index
    %c0_55 = arith.constant 0 : index
    %52 = vector.load %arg9[%c0_54, %c0_55] : memref<1x1xf32, #tpu.memory_space<vmem>>, vector<1x1xf32>
    %53 = vector.broadcast %52 : vector<1x1xf32> to vector<16x1xf32>
    %54 = arith.addf %51, %53 : vector<16x1xf32>
    %55 = vector.extract_strided_slice %17 {offsets = [0, 64], sizes = [16, 32], strides = [1, 1]} : vector<16x96xf32> to vector<16x32xf32>
    %c1_56 = arith.constant 1 : index
    %c0_57 = arith.constant 0 : index
    %56 = vector.load %arg13[%c1_56, %c0_57] : memref<18x32xf32, #tpu.memory_space<vmem>>, vector<16x32xf32>
    tpu.vector_store %arg13[%c1_56, %c0_57], %55 {strides = array<i32>} : memref<18x32xf32, #tpu.memory_space<vmem>>, vector<16x32xf32>,
    %c0_58 = arith.constant 0 : index
    %c0_59 = arith.constant 0 : index
    %57 = vector.load %arg13[%c0_58, %c0_59] : memref<18x32xf32, #tpu.memory_space<vmem>>, vector<16x32xf32>
    %c1_60 = arith.constant 1 : index
    %c0_61 = arith.constant 0 : index
    %58 = vector.load %arg13[%c1_60, %c0_61] : memref<18x32xf32, #tpu.memory_space<vmem>>, vector<16x32xf32>
    %c2_62 = arith.constant 2 : index
    %c0_63 = arith.constant 0 : index
    %59 = vector.load %arg13[%c2_62, %c0_63] : memref<18x32xf32, #tpu.memory_space<vmem>>, vector<16x32xf32>
    %60 = tpu.concatenate %57, %58, %59 in 1 : vector<16x32xf32>, vector<16x32xf32>, vector<16x32xf32> -> vector<16x96xf32>
    %61 = arith.truncf %60 : vector<16x96xf32> to vector<16x96xbf16>
    %c0_64 = arith.constant 0 : index
    %c0_65 = arith.constant 0 : index
    %62 = vector.load %arg10[%c0_64, %c0_65] : memref<96x3xbf16, #tpu.memory_space<vmem>>, vector<96x3xbf16>
    %cst_66 = arith.constant dense<0.000000e+00> : vector<16x3xf32>
    %63 = tpu.matmul %61, %62, %cst_66 {dimension_numbers = #tpu.dot_dimension_numbers<[1], [0], [0], [1], [0, 0, 1, 1], [], []>} : vector<16x96xbf16>, vector<96x3xbf16>, vector<16x3xf32> -> vector<16x3xf32>
    %c0_67 = arith.constant 0 : index
    %c0_68 = arith.constant 0 : index
    %64 = vector.load %arg11[%c0_67, %c0_68] : memref<1x3xf32, #tpu.memory_space<vmem>>, vector<1x3xf32>
    %65 = vector.broadcast %64 : vector<1x3xf32> to vector<16x3xf32>
    %66 = arith.addf %63, %65 : vector<16x3xf32>
    %67 = tpu.concatenate %29, %54, %66 in 1 : vector<16x2xf32>, vector<16x1xf32>, vector<16x3xf32> -> vector<16x6xf32>
    %c0_69 = arith.constant 0 : index
    %c0_70 = arith.constant 0 : index
    %c0_71 = arith.constant 0 : index
    %68 = vector.load %arg12[%c0_69, %c0_70, %c0_71] : memref<1x16x6xf32, #tpu.memory_space<vmem>>, vector<1x16x6xf32>
    %69 = vector.shape_cast %68 : vector<1x16x6xf32> to vector<16x6xf32>
    %70 = vector.shape_cast %67 : vector<16x6xf32> to vector<1x16x6xf32>
    tpu.vector_store %arg12[%c0_69, %c0_70, %c0_71], %70 {strides = array<i32>} : memref<1x16x6xf32, #tpu.memory_space<vmem>>, vector<1x16x6xf32>,
    return
  }
  func.func @transform_0(%arg0: i32) -> (i32, i32, i32) {
    %c0_i32 = arith.constant 0 : i32
    %c0_i32_0 = arith.constant 0 : i32
    %c0_i32_1 = arith.constant 0 : i32
    return %arg0, %c0_i32, %c0_i32_0 : i32, i32, i32
  }
  func.func @transform_1(%arg0: i32) -> (i32, i32) {
    %c0_i32 = arith.constant 0 : i32
    %c0_i32_0 = arith.constant 0 : i32
    %c0_i32_1 = arith.constant 0 : i32
    return %c0_i32, %c0_i32_0 : i32, i32
  }
  func.func @transform_2(%arg0: i32) -> (i32, i32) {
    %c0_i32 = arith.constant 0 : i32
    %c0_i32_0 = arith.constant 0 : i32
    %c0_i32_1 = arith.constant 0 : i32
    return %c0_i32, %c0_i32_0 : i32, i32
  }
  func.func @transform_3(%arg0: i32) -> (i32, i32) {
    %c0_i32 = arith.constant 0 : i32
    %c0_i32_0 = arith.constant 0 : i32
    %c0_i32_1 = arith.constant 0 : i32
    return %c0_i32, %c0_i32_0 : i32, i32
  }
  func.func @transform_4(%arg0: i32) -> (i32, i32) {
    %c0_i32 = arith.constant 0 : i32
    %c0_i32_0 = arith.constant 0 : i32
    %c0_i32_1 = arith.constant 0 : i32
    return %c0_i32, %c0_i32_0 : i32, i32
  }
  func.func @transform_5(%arg0: i32) -> (i32, i32) {
    %c0_i32 = arith.constant 0 : i32
    %c0_i32_0 = arith.constant 0 : i32
    %c0_i32_1 = arith.constant 0 : i32
    return %c0_i32, %c0_i32_0 : i32, i32
  }
  func.func @transform_6(%arg0: i32) -> (i32, i32) {
    %c0_i32 = arith.constant 0 : i32
    %c0_i32_0 = arith.constant 0 : i32
    %c0_i32_1 = arith.constant 0 : i32
    return %c0_i32, %c0_i32_0 : i32, i32
  }
  func.func @transform_7(%arg0: i32) -> (i32, i32) {
    %c0_i32 = arith.constant 0 : i32
    %c0_i32_0 = arith.constant 0 : i32
    %c0_i32_1 = arith.constant 0 : i32
    return %c0_i32, %c0_i32_0 : i32, i32
  }
  func.func @transform_8(%arg0: i32) -> (i32, i32) {
    %c0_i32 = arith.constant 0 : i32
    %c0_i32_0 = arith.constant 0 : i32
    %c0_i32_1 = arith.constant 0 : i32
    return %c0_i32, %c0_i32_0 : i32, i32
  }
  func.func @transform_9(%arg0: i32) -> (i32, i32) {
    %c0_i32 = arith.constant 0 : i32
    %c0_i32_0 = arith.constant 0 : i32
    %c0_i32_1 = arith.constant 0 : i32
    return %c0_i32, %c0_i32_0 : i32, i32
  }
  func.func @transform_10(%arg0: i32) -> (i32, i32) {
    %c0_i32 = arith.constant 0 : i32
    %c0_i32_0 = arith.constant 0 : i32
    %c0_i32_1 = arith.constant 0 : i32
    return %c0_i32, %c0_i32_0 : i32, i32
  }
  func.func @transform_11(%arg0: i32) -> (i32, i32, i32) {
    %c0_i32 = arith.constant 0 : i32
    %c0_i32_0 = arith.constant 0 : i32
    %c0_i32_1 = arith.constant 0 : i32
    return %arg0, %c0_i32, %c0_i32_0 : i32, i32, i32
  }
}

</mosaic_0001>

<llo_original>
// kernel: tpu_custom_call.1
$region0: #{tpu_custom_call.1}
  #allocation0 [shape = 'u32[]', space=smem, size = 0x4, offset = 0x4, fixed_abs, tag = 'smem constant byte address 0x4 - core index']
  #allocation1 [shape = 'u32[144,128]{1,0:T(1,128)}', space=vmem, size = 0x12000, scoped, tag = 'internal scratch']
  #allocation2 [shape = 'f32[18,32]{1,0:T(8,128)}', space=vmem, size = 0x3000, scoped, tag = 'scratch operand']
  #allocation3 [shape = 'f32[1,1]{1,0:T(1,128)S(1)}', space=vmem, size = 0x200, scoped, tag = 'scoped memory for tpu_custom_call.1']
  %s0 = inlined_call_operand.vmem [shape: bf16[2,16,32], index: 0, kind: input, shape index: {}]
  %s1 = inlined_call_operand.vmem [shape: bf16[96,96], index: 1, kind: input, shape index: {}]
  %s2 = inlined_call_operand.vmem [shape: f32[1,96], index: 2, kind: input, shape index: {}]
  %s3 = inlined_call_operand.vmem [shape: bf16[96,2], index: 3, kind: input, shape index: {}]
  %s4 = inlined_call_operand.vmem [shape: f32[1,2], index: 4, kind: input, shape index: {}]
  %s5 = inlined_call_operand.vmem [shape: bf16[96,32], index: 5, kind: input, shape index: {}]
  %s6 = inlined_call_operand.vmem [shape: f32[1,32], index: 6, kind: input, shape index: {}]
  %s7 = inlined_call_operand.vmem [shape: bf16[96,1], index: 7, kind: input, shape index: {}]
  %s8 = inlined_call_operand.<no memory space> [shape: f32[1,1], index: 8, kind: input, shape index: {}]
  %s9 = inlined_call_operand.vmem [shape: bf16[96,3], index: 9, kind: input, shape index: {}]
  %s10 = inlined_call_operand.vmem [shape: f32[1,3], index: 10, kind: input, shape index: {}]
  %s11 = inlined_call_operand.vmem [shape: f32[2,16,6], index: 11, kind: output, shape index: {}]
  %s12 = sld [smem:[#allocation0]]
  $region77: #{tpu_custom_call.1} parent=0
    _
  %s14 = ssub.s32 1, %s12
  %s15 = scalar_select 0, %s14, %s12
  %v16 = vstv %s8
  %17 = vst [vmem:[#allocation3] sm:$0x1] %v16
  loop: start=0, step=1, limit=4
  $region2: #{tpu_custom_call.1} parent=0 // loop_pre_header
    _
  $region3: #{tpu_custom_call.1} parent=0 // loop_header
    %s19 = sphi 0, %s23
    %p20 = scmp.ge.s32.totalorder %s19, 4
    %s29 = sphi 0, %s31
    %s32 = sphi 0, %s29
    %s33 = sphi 0, %s32
    %s49 = sphi 0, %s33
    %s53 = sphi 0, %s53
    %s55 = sphi 0, %s53
    %s56 = sphi 0, %s55
    %s70 = sphi 0, %s56
    %s74 = sphi 0, %s74
    %s76 = sphi 0, %s74
    %s77 = sphi 0, %s76
    %s91 = sphi 0, %s77
    %s95 = sphi 0, %s95
    %s97 = sphi 0, %s95
    %s98 = sphi 0, %s97
    %s112 = sphi 0, %s98
    %s116 = sphi 0, %s116
    %s118 = sphi 0, %s116
    %s119 = sphi 0, %s118
    %s133 = sphi 0, %s119
    %s137 = sphi 0, %s137
    %s139 = sphi 0, %s137
    %s140 = sphi 0, %s139
    %s154 = sphi 0, %s140
    %s158 = sphi 0, %s158
    %s160 = sphi 0, %s158
    %s161 = sphi 0, %s160
    %s175 = sphi 0, %s161
    %s179 = sphi 0, %s179
    %s181 = sphi 0, %s179
    %s182 = sphi 0, %s181
    %s196 = sphi 0, %s182
    %s200 = sphi 0, %s200
    %s202 = sphi 0, %s200
    %s203 = sphi 0, %s202
    %s217 = sphi 0, %s203
    %s221 = sphi 0, %s221
    %s223 = sphi 0, %s221
    %s224 = sphi 0, %s223
    %s238 = sphi 0, %s224
    %s242 = sphi 0, %s242
    %s244 = sphi 0, %s242
    %s245 = sphi 0, %s244
    %s259 = sphi 0, %s245
    %s265 = sphi 0, %s267
    %s268 = sphi 0, %s265
    %s269 = sphi 0, %s268
    %s285 = sphi 0, %s269
  $region4: #{tpu_custom_call.1} parent=0 // loop_header_branch
    %22 = sbr.rel (%p20) target = $region8
  $region5: #{tpu_custom_call.1} parent=0 // loop_body
    %s24 = ssub.s32 %s19, 1
    %s25 = ssub.s32 %s19, 2
    %s26 = sadd.s32 %s19, 1
    %s27 = ssub.s32 %s19, %s26
    %p28 = scmp.eq.s32.totalorder %s27, 0
    %s30 = sadd.s32 %s29, 1
    %s31 = scalar_select %p28, %s29, %s30
    %p34 = pneg %p28
    %p35 = scmp.eq.s32.totalorder %s19, 1
    %p36 = por %p34, %p35
    %p37 = scmp.ne.s32.totalorder %s29, %s32
    %p38 = scmp.eq.s32.totalorder %s19, 0
    %p39 = por %p37, %p38
    %p40 = scmp.ne.s32.totalorder %s29, %s32
    %p41 = scmp.eq.s32.totalorder %s24, 1
    %p42 = por %p40, %p41
    %p43 = scmp.ne.s32.totalorder %s32, %s33
    %p44 = scmp.eq.s32.totalorder %s24, 0
    %p45 = por %p43, %p44
    %p46 = scmp.ne.s32.totalorder %s32, %s33
    %p47 = scmp.eq.s32.totalorder %s25, 1
    %p48 = por %p46, %p47
    %p50 = scmp.ne.s32.totalorder %s33, %s49
    %p51 = scmp.eq.s32.totalorder %s25, 0
    %p52 = por %p50, %p51
    %s54 = sadd.s32 %s53, 1
    %p57 = scmp.eq.s32.totalorder %s19, 1
    %p58 = scmp.ne.s32.totalorder %s53, %s55
    %p59 = scmp.eq.s32.totalorder %s19, 0
    %p60 = por %p58, %p59
    %p61 = scmp.ne.s32.totalorder %s53, %s55
    %p62 = scmp.eq.s32.totalorder %s24, 1
    %p63 = por %p61, %p62
    %p64 = scmp.ne.s32.totalorder %s55, %s56
    %p65 = scmp.eq.s32.totalorder %s24, 0
    %p66 = por %p64, %p65
    %p67 = scmp.ne.s32.totalorder %s55, %s56
    %p68 = scmp.eq.s32.totalorder %s25, 1
    %p69 = por %p67, %p68
    %p71 = scmp.ne.s32.totalorder %s56, %s70
    %p72 = scmp.eq.s32.totalorder %s25, 0
    %p73 = por %p71, %p72
    %s75 = sadd.s32 %s74, 1
    %p78 = scmp.eq.s32.totalorder %s19, 1
    %p79 = scmp.ne.s32.totalorder %s74, %s76
    %p80 = scmp.eq.s32.totalorder %s19, 0
    %p81 = por %p79, %p80
    %p82 = scmp.ne.s32.totalorder %s74, %s76
    %p83 = scmp.eq.s32.totalorder %s24, 1
    %p84 = por %p82, %p83
    %p85 = scmp.ne.s32.totalorder %s76, %s77
    %p86 = scmp.eq.s32.totalorder %s24, 0
    %p87 = por %p85, %p86
    %p88 = scmp.ne.s32.totalorder %s76, %s77
    %p89 = scmp.eq.s32.totalorder %s25, 1
    %p90 = por %p88, %p89
    %p92 = scmp.ne.s32.totalorder %s77, %s91
    %p93 = scmp.eq.s32.totalorder %s25, 0
    %p94 = por %p92, %p93
    %s96 = sadd.s32 %s95, 1
    %p99 = scmp.eq.s32.totalorder %s19, 1
    %p100 = scmp.ne.s32.totalorder %s95, %s97
    %p101 = scmp.eq.s32.totalorder %s19, 0
    %p102 = por %p100, %p101
    %p103 = scmp.ne.s32.totalorder %s95, %s97
    %p104 = scmp.eq.s32.totalorder %s24, 1
    %p105 = por %p103, %p104
    %p106 = scmp.ne.s32.totalorder %s97, %s98
    %p107 = scmp.eq.s32.totalorder %s24, 0
    %p108 = por %p106, %p107
    %p109 = scmp.ne.s32.totalorder %s97, %s98
    %p110 = scmp.eq.s32.totalorder %s25, 1
    %p111 = por %p109, %p110
    %p113 = scmp.ne.s32.totalorder %s98, %s112
    %p114 = scmp.eq.s32.totalorder %s25, 0
    %p115 = por %p113, %p114
    %s117 = sadd.s32 %s116, 1
    %p120 = scmp.eq.s32.totalorder %s19, 1
    %p121 = scmp.ne.s32.totalorder %s116, %s118
    %p122 = scmp.eq.s32.totalorder %s19, 0
    %p123 = por %p121, %p122
    %p124 = scmp.ne.s32.totalorder %s116, %s118
    %p125 = scmp.eq.s32.totalorder %s24, 1
    %p126 = por %p124, %p125
    %p127 = scmp.ne.s32.totalorder %s118, %s119
    %p128 = scmp.eq.s32.totalorder %s24, 0
    %p129 = por %p127, %p128
    %p130 = scmp.ne.s32.totalorder %s118, %s119
    %p131 = scmp.eq.s32.totalorder %s25, 1
    %p132 = por %p130, %p131
    %p134 = scmp.ne.s32.totalorder %s119, %s133
    %p135 = scmp.eq.s32.totalorder %s25, 0
    %p136 = por %p134, %p135
    %s138 = sadd.s32 %s137, 1
    %p141 = scmp.eq.s32.totalorder %s19, 1
    %p142 = scmp.ne.s32.totalorder %s137, %s139
    %p143 = scmp.eq.s32.totalorder %s19, 0
    %p144 = por %p142, %p143
    %p145 = scmp.ne.s32.totalorder %s137, %s139
    %p146 = scmp.eq.s32.totalorder %s24, 1
    %p147 = por %p145, %p146
    %p148 = scmp.ne.s32.totalorder %s139, %s140
    %p149 = scmp.eq.s32.totalorder %s24, 0
    %p150 = por %p148, %p149
    %p151 = scmp.ne.s32.totalorder %s139, %s140
    %p152 = scmp.eq.s32.totalorder %s25, 1
    %p153 = por %p151, %p152
    %p155 = scmp.ne.s32.totalorder %s140, %s154
    %p156 = scmp.eq.s32.totalorder %s25, 0
    %p157 = por %p155, %p156
    %s159 = sadd.s32 %s158, 1
    %p162 = scmp.eq.s32.totalorder %s19, 1
    %p163 = scmp.ne.s32.totalorder %s158, %s160
    %p164 = scmp.eq.s32.totalorder %s19, 0
    %p165 = por %p163, %p164
    %p166 = scmp.ne.s32.totalorder %s158, %s160
    %p167 = scmp.eq.s32.totalorder %s24, 1
    %p168 = por %p166, %p167
    %p169 = scmp.ne.s32.totalorder %s160, %s161
    %p170 = scmp.eq.s32.totalorder %s24, 0
    %p171 = por %p169, %p170
    %p172 = scmp.ne.s32.totalorder %s160, %s161
    %p173 = scmp.eq.s32.totalorder %s25, 1
    %p174 = por %p172, %p173
    %p176 = scmp.ne.s32.totalorder %s161, %s175
    %p177 = scmp.eq.s32.totalorder %s25, 0
    %p178 = por %p176, %p177
    %s180 = sadd.s32 %s179, 1
    %p183 = scmp.eq.s32.totalorder %s19, 1
    %p184 = scmp.ne.s32.totalorder %s179, %s181
    %p185 = scmp.eq.s32.totalorder %s19, 0
    %p186 = por %p184, %p185
    %p187 = scmp.ne.s32.totalorder %s179, %s181
    %p188 = scmp.eq.s32.totalorder %s24, 1
    %p189 = por %p187, %p188
    %p190 = scmp.ne.s32.totalorder %s181, %s182
    %p191 = scmp.eq.s32.totalorder %s24, 0
    %p192 = por %p190, %p191
    %p193 = scmp.ne.s32.totalorder %s181, %s182
    %p194 = scmp.eq.s32.totalorder %s25, 1
    %p195 = por %p193, %p194
    %p197 = scmp.ne.s32.totalorder %s182, %s196
    %p198 = scmp.eq.s32.totalorder %s25, 0
    %p199 = por %p197, %p198
    %s201 = sadd.s32 %s200, 1
    %p204 = scmp.eq.s32.totalorder %s19, 1
    %p205 = scmp.ne.s32.totalorder %s200, %s202
    %p206 = scmp.eq.s32.totalorder %s19, 0
    %p207 = por %p205, %p206
    %p208 = scmp.ne.s32.totalorder %s200, %s202
    %p209 = scmp.eq.s32.totalorder %s24, 1
    %p210 = por %p208, %p209
    %p211 = scmp.ne.s32.totalorder %s202, %s203
    %p212 = scmp.eq.s32.totalorder %s24, 0
    %p213 = por %p211, %p212
    %p214 = scmp.ne.s32.totalorder %s202, %s203
    %p215 = scmp.eq.s32.totalorder %s25, 1
    %p216 = por %p214, %p215
    %p218 = scmp.ne.s32.totalorder %s203, %s217
    %p219 = scmp.eq.s32.totalorder %s25, 0
    %p220 = por %p218, %p219
    %s222 = sadd.s32 %s221, 1
    %p225 = scmp.eq.s32.totalorder %s19, 1
    %p226 = scmp.ne.s32.totalorder %s221, %s223
    %p227 = scmp.eq.s32.totalorder %s19, 0
    %p228 = por %p226, %p227
    %p229 = scmp.ne.s32.totalorder %s221, %s223
    %p230 = scmp.eq.s32.totalorder %s24, 1
    %p231 = por %p229, %p230
    %p232 = scmp.ne.s32.totalorder %s223, %s224
    %p233 = scmp.eq.s32.totalorder %s24, 0
    %p234 = por %p232, %p233
    %p235 = scmp.ne.s32.totalorder %s223, %s224
    %p236 = scmp.eq.s32.totalorder %s25, 1
    %p237 = por %p235, %p236
    %p239 = scmp.ne.s32.totalorder %s224, %s238
    %p240 = scmp.eq.s32.totalorder %s25, 0
    %p241 = por %p239, %p240
    %s243 = sadd.s32 %s242, 1
    %p246 = scmp.eq.s32.totalorder %s19, 1
    %p247 = scmp.ne.s32.totalorder %s242, %s244
    %p248 = scmp.eq.s32.totalorder %s19, 0
    %p249 = por %p247, %p248
    %p250 = scmp.ne.s32.totalorder %s242, %s244
    %p251 = scmp.eq.s32.totalorder %s24, 1
    %p252 = por %p250, %p251
    %p253 = scmp.ne.s32.totalorder %s244, %s245
    %p254 = scmp.eq.s32.totalorder %s24, 0
    %p255 = por %p253, %p254
    %p256 = scmp.ne.s32.totalorder %s244, %s245
    %p257 = scmp.eq.s32.totalorder %s25, 1
    %p258 = por %p256, %p257
    %p260 = scmp.ne.s32.totalorder %s245, %s259
    %p261 = scmp.eq.s32.totalorder %s25, 0
    %p262 = por %p260, %p261
    %s263 = ssub.s32 %s19, %s26
    %p264 = scmp.eq.s32.totalorder %s263, 0
    %s266 = sadd.s32 %s265, 1
    %s267 = scalar_select %p264, %s265, %s266
    %p270 = pneg %p264
    %p271 = scmp.eq.s32.totalorder %s19, 1
    %p272 = por %p270, %p271
    %p273 = scmp.ne.s32.totalorder %s265, %s268
    %p274 = scmp.eq.s32.totalorder %s19, 0
    %p275 = por %p273, %p274
    %p276 = scmp.ne.s32.totalorder %s265, %s268
    %p277 = scmp.eq.s32.totalorder %s24, 1
    %p278 = por %p276, %p277
    %p279 = scmp.ne.s32.totalorder %s268, %s269
    %p280 = scmp.eq.s32.totalorder %s24, 0
    %p281 = por %p279, %p280
    %p282 = scmp.ne.s32.totalorder %s268, %s269
    %p283 = scmp.eq.s32.totalorder %s25, 1
    %p284 = por %p282, %p283
    %p286 = scmp.ne.s32.totalorder %s269, %s285
    %p287 = scmp.eq.s32.totalorder %s25, 0
    %p288 = por %p286, %p287
    %p289 = scmp.le.s32.totalorder 1, %s19
    %p290 = scmp.lt.s32.totalorder %s19, 3
    %p291 = pnand %p289, %p290
    %p292 = pneg %p291
    // Predicated region
    $region9: #{tpu_custom_call.1} parent=5 // pred_check
      _
    $region10: #{tpu_custom_call.1} parent=5 // pred_check_branch
      %294 = sbr.rel (%p291) target = $region12
    $region11: #{tpu_custom_call.1} parent=5 // pred_region
      %s295 = ssub.s32 %s19, 1
      // Predicated region
      $region13: #{tpu_custom_call.1} parent=11 // pred_check
        %p296 = pneg %p66
      $region14: #{tpu_custom_call.1} parent=11 // pred_check_branch
        %298 = sbr.rel (%p296) target = $region16
      $region15: #{tpu_custom_call.1} parent=11 // pred_region
        _
      $region16: #{tpu_custom_call.1} parent=11 // pred_fallthru
        _
      // Predicated region
      $region17: #{tpu_custom_call.1} parent=11 // pred_check
        %p299 = pneg %p87
      $region18: #{tpu_custom_call.1} parent=11 // pred_check_branch
        %301 = sbr.rel (%p299) target = $region20
      $region19: #{tpu_custom_call.1} parent=11 // pred_region
        _
      $region20: #{tpu_custom_call.1} parent=11 // pred_fallthru
        _
      // Predicated region
      $region21: #{tpu_custom_call.1} parent=11 // pred_check
        %p302 = pneg %p108
      $region22: #{tpu_custom_call.1} parent=11 // pred_check_branch
        %304 = sbr.rel (%p302) target = $region24
      $region23: #{tpu_custom_call.1} parent=11 // pred_region
        _
      $region24: #{tpu_custom_call.1} parent=11 // pred_fallthru
        _
      // Predicated region
      $region25: #{tpu_custom_call.1} parent=11 // pred_check
        %p305 = pneg %p129
      $region26: #{tpu_custom_call.1} parent=11 // pred_check_branch
        %307 = sbr.rel (%p305) target = $region28
      $region27: #{tpu_custom_call.1} parent=11 // pred_region
        _
      $region28: #{tpu_custom_call.1} parent=11 // pred_fallthru
        _
      // Predicated region
      $region29: #{tpu_custom_call.1} parent=11 // pred_check
        %p308 = pneg %p150
      $region30: #{tpu_custom_call.1} parent=11 // pred_check_branch
        %310 = sbr.rel (%p308) target = $region32
      $region31: #{tpu_custom_call.1} parent=11 // pred_region
        _
      $region32: #{tpu_custom_call.1} parent=11 // pred_fallthru
        _
      // Predicated region
      $region33: #{tpu_custom_call.1} parent=11 // pred_check
        %p311 = pneg %p171
      $region34: #{tpu_custom_call.1} parent=11 // pred_check_branch
        %313 = sbr.rel (%p311) target = $region36
      $region35: #{tpu_custom_call.1} parent=11 // pred_region
        _
      $region36: #{tpu_custom_call.1} parent=11 // pred_fallthru
        _
      // Predicated region
      $region37: #{tpu_custom_call.1} parent=11 // pred_check
        %p314 = pneg %p192
      $region38: #{tpu_custom_call.1} parent=11 // pred_check_branch
        %316 = sbr.rel (%p314) target = $region40
      $region39: #{tpu_custom_call.1} parent=11 // pred_region
        _
      $region40: #{tpu_custom_call.1} parent=11 // pred_fallthru
        _
      // Predicated region
      $region41: #{tpu_custom_call.1} parent=11 // pred_check
        %p317 = pneg %p213
      $region42: #{tpu_custom_call.1} parent=11 // pred_check_branch
        %319 = sbr.rel (%p317) target = $region44
      $region43: #{tpu_custom_call.1} parent=11 // pred_region
        _
      $region44: #{tpu_custom_call.1} parent=11 // pred_fallthru
        _
      // Predicated region
      $region45: #{tpu_custom_call.1} parent=11 // pred_check
        %p320 = pneg %p234
      $region46: #{tpu_custom_call.1} parent=11 // pred_check_branch
        %322 = sbr.rel (%p320) target = $region48
      $region47: #{tpu_custom_call.1} parent=11 // pred_region
        _
      $region48: #{tpu_custom_call.1} parent=11 // pred_fallthru
        _
      // Predicated region
      $region49: #{tpu_custom_call.1} parent=11 // pred_check
        %p323 = pneg %p255
      $region50: #{tpu_custom_call.1} parent=11 // pred_check_branch
        %325 = sbr.rel (%p323) target = $region52
      $region51: #{tpu_custom_call.1} parent=11 // pred_region
        _
      $region52: #{tpu_custom_call.1} parent=11 // pred_fallthru
        _
    $region12: #{tpu_custom_call.1} parent=5 // pred_fallthru
      _
    %p326 = scmp.lt.s32.totalorder %s19, 2
    // Predicated region
    $region53: #{tpu_custom_call.1} parent=5 // pred_check
      %p327 = pneg %p326
    $region54: #{tpu_custom_call.1} parent=5 // pred_check_branch
      %329 = sbr.rel (%p327) target = $region56
    $region55: #{tpu_custom_call.1} parent=5 // pred_region
      // Predicated region
      $region57: #{tpu_custom_call.1} parent=55 // pred_check
        %p330 = pneg %p39
      $region58: #{tpu_custom_call.1} parent=55 // pred_check_branch
        %332 = sbr.rel (%p330) target = $region60
      $region59: #{tpu_custom_call.1} parent=55 // pred_region
        %p333 = scmp.lt.s32.totalorder %s19, 1
        %s334 = scalar_select %p333, %s19, 1
        %s335 = smul.addr %s334, 2
        %s336 = smul.addr %s335, 4
        %s337 = scalar_lea.vmem %s0, %s336
      $region60: #{tpu_custom_call.1} parent=55 // pred_fallthru
        _
    $region56: #{tpu_custom_call.1} parent=5 // pred_fallthru
      _
    %p338 = scmp.le.s32.totalorder 1, %s19
    %p339 = scmp.lt.s32.totalorder %s19, 3
    %p340 = pnand %p338, %p339
    %p341 = pneg %p340
    // Predicated region
    $region61: #{tpu_custom_call.1} parent=5 // pred_check
      _
    $region62: #{tpu_custom_call.1} parent=5 // pred_check_branch
      %343 = sbr.rel (%p340) target = $region64
    $region63: #{tpu_custom_call.1} parent=5 // pred_region
      %s344 = ssub.s32 %s19, 1
      %p345 = scmp.lt.s32.totalorder %s24, 1
      %s346 = scalar_select %p345, %s24, 1
      %s347 = smul.addr %s346, 2
      %s348 = smul.addr %s347, 4
      %s349 = scalar_lea.vmem %s0, %s348
      %p350 = pneg %p45
      %p351 = pneg %p42
      %p352 = pneg %p66
      %p353 = pneg %p63
      %p354 = pneg %p87
      %p355 = pneg %p84
      %p356 = pneg %p108
      %p357 = pneg %p105
      %p358 = pneg %p129
      %p359 = pneg %p126
      %p360 = pneg %p150
      %p361 = pneg %p147
      %p362 = pneg %p171
      %p363 = pneg %p168
      %p364 = pneg %p192
      %p365 = pneg %p189
      %p366 = pneg %p213
      %p367 = pneg %p210
      %p368 = pneg %p234
      %p369 = pneg %p231
      %p370 = pneg %p255
      %p371 = pneg %p252
      %p372 = pneg %p281
      %p373 = pneg %p278
      %p374 = scmp.lt.s32.totalorder %s24, 1
      %s375 = scalar_select %p374, %s24, 1
      %s376 = smul.addr %s375, 2
      %s377 = smul.addr %s376, 8
      %s378 = scalar_lea.vmem %s11, %s377
      %p379 = scmp.lt.s32.totalorder %s24, 1
      %s380 = scalar_select %p379, %s24, 1
      %s381 = smul.addr %s380, 2
      %s382 = smul.addr %s381, 4
      %s383 = scalar_lea.vmem %s0, %s382
      %p384 = scmp.lt.s32.totalorder %s24, 1
      %s385 = scalar_select %p384, %s24, 1
      %s386 = smul.addr %s385, 2
      %s387 = smul.addr %s386, 8
      %s388 = scalar_lea.vmem %s11, %s387
      %vm390 = vcmask 261120
      %391 = vst.msk [vmem:[#allocation2] sm:$0xff] %vm390, 0.0
      %392 = vst.msk [vmem:[#allocation2 + $0x8] sm:$0xff] %vm390, 0.0
      %vm393 = vcmask 254976
      %394 = vst.msk [vmem:[#allocation2 + $0x10] sm:$0x3] %vm393, 0.0
      %v395 = vld [vmem:[%s383] sm:$0xf]
      %v396 = vld [vmem:[%s383 + $0x4] sm:$0xf]
      %v397 = vunpack.c.l.bf16 %v395
      %v398 = vunpack.c.l.bf16 %v396
      %399 = vst.msk [vmem:[#allocation2 + $0x1] sm:$0xff] %vm390, %v397
      %400 = vst.msk [vmem:[#allocation2 + $0x9] sm:$0xff] %vm390, %v398
      %v401 = vld [vmem:[#allocation2] sm:$0xff]
      %v402 = vld [vmem:[#allocation2 + $0x8] sm:$0xff]
      %v403 = vld [vmem:[#allocation2 + $0x1] sm:$0xff]
      %v404 = vld [vmem:[#allocation2 + $0x9] sm:$0xff]
      %v405 = vld [vmem:[#allocation2 + $0x2] sm:$0xff]
      %v406 = vld [vmem:[#allocation2 + $0xa] sm:$0xff]
      %409 = vrot.lane.b32.xlu0 %v403, 32
      %v410 = vpop.permute.xlu0 %409
      %411 = vrot.lane.b32.xlu0 %v404, 32
      %v412 = vpop.permute.xlu0 %411
      %417 = vrot.lane.b32.xlu0 %v405, 64
      %v418 = vpop.permute.xlu0 %417
      %419 = vrot.lane.b32.xlu0 %v406, 64
      %v420 = vpop.permute.xlu0 %419
      %v423 = vsel %vm390, %v401, %v410
      %v424 = vsel %vm390, %v402, %v412
      %vm425 = vcmask 523264
      %v426 = vsel %vm425, %v423, %v418
      %v427 = vsel %vm425, %v424, %v420
      %v428 = vpack.c.bf16 %v427, %v426
      %v429 = vld [vmem:[%s1] sm:$0xf]
      %v430 = vld [vmem:[%s1 + $0x4] sm:$0xf]
      %v431 = vld [vmem:[%s1 + $0x8] sm:$0xf]
      %v432 = vld [vmem:[%s1 + $0xc] sm:$0xf]
      %v433 = vld [vmem:[%s1 + $0x10] sm:$0xf]
      %v434 = vld [vmem:[%s1 + $0x14] sm:$0xf]
      %v435 = vld [vmem:[%s1 + $0x18] sm:$0xf]
      %v436 = vld [vmem:[%s1 + $0x1c] sm:$0xf]
      %v437 = vld [vmem:[%s1 + $0x20] sm:$0xf]
      %v438 = vld [vmem:[%s1 + $0x24] sm:$0xf]
      %v439 = vld [vmem:[%s1 + $0x28] sm:$0xf]
      %v440 = vld [vmem:[%s1 + $0x2c] sm:$0xf]
      %v441 = vld [vmem:[%s2] sm:$0x1]
      %v443 = vlaneseq
      %v444 = vshrl.u32 %v443, 7
      %v445 = vsub.s32 0, %v444
      %v446 = vrot.slane %v441, %v445
      %v460 = vunpack.c.l.b16 %v429
      %v461 = vunpack.c.l.b16 %v430
      %v462 = vunpack.c.l.b16 %v431
      %v463 = vunpack.c.l.b16 %v432
      %v464 = vunpack.c.l.b16 %v433
      %v465 = vunpack.c.l.b16 %v434
      %v466 = vunpack.c.l.b16 %v435
      %v467 = vunpack.c.l.b16 %v436
      %v468 = vunpack.c.l.b16 %v437
      %v469 = vunpack.c.l.b16 %v438
      %v470 = vunpack.c.l.b16 %v439
      %v471 = vunpack.c.l.b16 %v440
      %v472 = vpack.c.b16 %v461, %v460
      %v473 = vpack.c.b16 %v463, %v462
      %v474 = vpack.c.b16 %v465, %v464
      %v475 = vpack.c.b16 %v467, %v466
      %v476 = vpack.c.b16 %v469, %v468
      %v477 = vpack.c.b16 %v471, %v470
      %vm484 = vcmask 785408
      %v486 = vsel %vm484, %v428, 0
      %488 = vmatprep.subr.bf16.mxu0 0
      %489 = vmatpush1.bf16.msra.mxu0 %v472
      %490 = vmatprep.subr.bf16.mxu0 0
      %491 = vmatpush1.bf16.msra.mxu0 %v473
      %492 = vmatprep.subr.bf16.mxu0 0
      %493 = vmatpush1.bf16.msra.mxu0 %v474
      %494 = vmatprep.subr.bf16.mxu0 0
      %495 = vmatpush1.bf16.msra.mxu0 %v475
      %496 = vmatprep.subr.bf16.mxu0 0
      %497 = vmatpush1.bf16.msra.mxu0 %v476
      %498 = vmatprep.subr.bf16.mxu0 0
      %499 = vmatpush1.bf16.msra.mxu0 %v477
      %500 = vmatprep.subr.bf16.mxu0 0
      %501 = vmatpush1.bf16.msra.mxu0 0
      %502 = vmatprep.subr.bf16.mxu0 0
      %503 = vmatpush1.bf16.msra.mxu0 0
      %504 = vmatprep.subr.bf16.mxu0 0
      %505 = vmatpush1.bf16.msra.mxu0 0
      %506 = vmatprep.subr.bf16.mxu0 0
      %507 = vmatpush1.bf16.msra.mxu0 0
      %508 = vmatprep.subr.bf16.mxu0 0
      %509 = vmatpush1.bf16.msra.mxu0 0
      %510 = vmatprep.subr.bf16.mxu0 0
      %511 = vmatpush1.bf16.msra.mxu0 0
      %512 = vmatprep.subr.bf16.mxu0 0
      %513 = vmatpush1.bf16.msra.mxu0 0
      %514 = vmatprep.subr.bf16.mxu0 0
      %515 = vmatpush1.bf16.msra.mxu0 0
      %516 = vmatprep.subr.bf16.mxu0 0
      %517 = vmatpush1.bf16.msra.mxu0 0
      %518 = vmatprep.subr.bf16.mxu0 0
      %519 = vmatpush1.bf16.msra.mxu0 0
      %520 = vmatprep.mubr.bf16.mxu0 0
      %521 = vmatmul.mubr.bf16.gmra.mrb[0].mxu0 %v486
      %v522 = vpop.f32.mrb[0].mxu0
      %v523 = vadd.f32 %v446, %v522
      %v524 = vpop.f32.mrb[0].mxu0
      %v525 = vpop.f32.mrb[0].mxu0
      %v526 = vadd.f32 %v446, %v525
      %v527 = vpop.f32.mrb[0].mxu0
      %528 = vdwg.mxu0
      %v529 = vmax.f32 %v523, 0.0
      %v530 = vmax.f32 %v526, 0.0
      %531 = vst.msk [vmem:[#allocation2 + $0x1] sm:$0xff] %vm390, %v529
      %532 = vst.msk [vmem:[#allocation2 + $0x9] sm:$0xff] %vm390, %v530
      %v533 = vld [vmem:[#allocation2] sm:$0xff]
      %v534 = vld [vmem:[#allocation2 + $0x8] sm:$0xff]
      %v535 = vld [vmem:[#allocation2 + $0x1] sm:$0xff]
      %v536 = vld [vmem:[#allocation2 + $0x9] sm:$0xff]
      %v537 = vld [vmem:[#allocation2 + $0x2] sm:$0xff]
      %v538 = vld [vmem:[#allocation2 + $0xa] sm:$0xff]
      %541 = vrot.lane.b32.xlu0 %v535, 32
      %v542 = vpop.permute.xlu0 %541
      %543 = vrot.lane.b32.xlu0 %v536, 32
      %v544 = vpop.permute.xlu0 %543
      %549 = vrot.lane.b32.xlu0 %v537, 64
      %v550 = vpop.permute.xlu0 %549
      %551 = vrot.lane.b32.xlu0 %v538, 64
      %v552 = vpop.permute.xlu0 %551
      %v555 = vsel %vm390, %v533, %v542
      %v556 = vsel %vm390, %v534, %v544
      %v557 = vsel %vm425, %v555, %v550
      %v558 = vsel %vm425, %v556, %v552
      %v559 = vpack.c.bf16 %v558, %v557
      %v560 = vld [vmem:[%s3] sm:$0xf]
      %v561 = vld [vmem:[%s3 + $0x4] sm:$0xf]
      %v562 = vld [vmem:[%s3 + $0x8] sm:$0xf]
      %v563 = vld [vmem:[%s3 + $0xc] sm:$0xf]
      %v564 = vld [vmem:[%s3 + $0x10] sm:$0xf]
      %v565 = vld [vmem:[%s3 + $0x14] sm:$0xf]
      %v566 = vld [vmem:[%s3 + $0x18] sm:$0xf]
      %v567 = vld [vmem:[%s3 + $0x1c] sm:$0xf]
      %v568 = vld [vmem:[%s3 + $0x20] sm:$0xf]
      %v569 = vld [vmem:[%s3 + $0x24] sm:$0xf]
      %v570 = vld [vmem:[%s3 + $0x28] sm:$0xf]
      %v571 = vld [vmem:[%s3 + $0x2c] sm:$0xf]
      %v572 = vld [vmem:[%s4] sm:$0x1]
      %v574 = vlaneseq
      %v575 = vshrl.u32 %v574, 7
      %v576 = vsub.s32 0, %v575
      %v577 = vrot.slane %v572, %v576
      %v591 = vunpack.c.l.b16 %v560
      %v592 = vunpack.c.l.b16 %v561
      %v593 = vunpack.c.l.b16 %v562
      %v594 = vunpack.c.l.b16 %v563
      %v595 = vunpack.c.l.b16 %v564
      %v596 = vunpack.c.l.b16 %v565
      %v597 = vunpack.c.l.b16 %v566
      %v598 = vunpack.c.l.b16 %v567
      %v599 = vunpack.c.l.b16 %v568
      %v600 = vunpack.c.l.b16 %v569
      %v601 = vunpack.c.l.b16 %v570
      %v602 = vunpack.c.l.b16 %v571
      %v603 = vpack.c.b16 %v592, %v591
      %v604 = vpack.c.b16 %v594, %v593
      %v605 = vpack.c.b16 %v596, %v595
      %v606 = vpack.c.b16 %v598, %v597
      %v607 = vpack.c.b16 %v600, %v599
      %v608 = vpack.c.b16 %v602, %v601
      %v616 = vsel %vm484, %v559, 0
      %618 = vmatprep.subr.bf16.mxu0 0
      %619 = vmatpush1.bf16.msra.mxu0 %v603
      %620 = vmatprep.subr.bf16.mxu0 0
      %621 = vmatpush1.bf16.msra.mxu0 %v604
      %622 = vmatprep.subr.bf16.mxu0 0
      %623 = vmatpush1.bf16.msra.mxu0 %v605
      %624 = vmatprep.subr.bf16.mxu0 0
      %625 = vmatpush1.bf16.msra.mxu0 %v606
      %626 = vmatprep.subr.bf16.mxu0 0
      %627 = vmatpush1.bf16.msra.mxu0 %v607
      %628 = vmatprep.subr.bf16.mxu0 0
      %629 = vmatpush1.bf16.msra.mxu0 %v608
      %630 = vmatprep.subr.bf16.mxu0 0
      %631 = vmatpush1.bf16.msra.mxu0 0
      %632 = vmatprep.subr.bf16.mxu0 0
      %633 = vmatpush1.bf16.msra.mxu0 0
      %634 = vmatprep.subr.bf16.mxu0 0
      %635 = vmatpush1.bf16.msra.mxu0 0
      %636 = vmatprep.subr.bf16.mxu0 0
      %637 = vmatpush1.bf16.msra.mxu0 0
      %638 = vmatprep.subr.bf16.mxu0 0
      %639 = vmatpush1.bf16.msra.mxu0 0
      %640 = vmatprep.subr.bf16.mxu0 0
      %641 = vmatpush1.bf16.msra.mxu0 0
      %642 = vmatprep.subr.bf16.mxu0 0
      %643 = vmatpush1.bf16.msra.mxu0 0
      %644 = vmatprep.subr.bf16.mxu0 0
      %645 = vmatpush1.bf16.msra.mxu0 0
      %646 = vmatprep.subr.bf16.mxu0 0
      %647 = vmatpush1.bf16.msra.mxu0 0
      %648 = vmatprep.subr.bf16.mxu0 0
      %649 = vmatpush1.bf16.msra.mxu0 0
      %650 = vmatprep.mubr.bf16.mxu0 0
      %651 = vmatmul.mubr.bf16.gmra.mrb[0].mxu0 %v616
      %v652 = vpop.f32.mrb[0].mxu0
      %v653 = vadd.f32 %v577, %v652
      %v654 = vpop.f32.mrb[0].mxu0
      %v655 = vpop.f32.mrb[0].mxu0
      %v656 = vadd.f32 %v577, %v655
      %v657 = vpop.f32.mrb[0].mxu0
      %658 = vdwg.mxu0
      %661 = vrot.lane.b32.xlu0 %v529, 96
      %v662 = vpop.permute.xlu0 %661
      %663 = vrot.lane.b32.xlu0 %v530, 96
      %v664 = vpop.permute.xlu0 %663
      %667 = vst.msk [vmem:[#allocation2 + $0x1] sm:$0xff] %vm390, %v662
      %668 = vst.msk [vmem:[#allocation2 + $0x9] sm:$0xff] %vm390, %v664
      %v669 = vld [vmem:[#allocation2] sm:$0xff]
      %v670 = vld [vmem:[#allocation2 + $0x8] sm:$0xff]
      %v671 = vld [vmem:[#allocation2 + $0x1] sm:$0xff]
      %v672 = vld [vmem:[#allocation2 + $0x9] sm:$0xff]
      %v673 = vld [vmem:[#allocation2 + $0x2] sm:$0xff]
      %v674 = vld [vmem:[#allocation2 + $0xa] sm:$0xff]
      %677 = vrot.lane.b32.xlu0 %v671, 32
      %v678 = vpop.permute.xlu0 %677
      %679 = vrot.lane.b32.xlu0 %v672, 32
      %v680 = vpop.permute.xlu0 %679
      %685 = vrot.lane.b32.xlu0 %v673, 64
      %v686 = vpop.permute.xlu0 %685
      %687 = vrot.lane.b32.xlu0 %v674, 64
      %v688 = vpop.permute.xlu0 %687
      %v691 = vsel %vm390, %v669, %v678
      %v692 = vsel %vm390, %v670, %v680
      %v693 = vsel %vm425, %v691, %v686
      %v694 = vsel %vm425, %v692, %v688
      %v695 = vpack.c.bf16 %v694, %v693
      %v696 = vld [vmem:[%s5] sm:$0xf]
      %v697 = vld [vmem:[%s5 + $0x4] sm:$0xf]
      %v698 = vld [vmem:[%s5 + $0x8] sm:$0xf]
      %v699 = vld [vmem:[%s5 + $0xc] sm:$0xf]
      %v700 = vld [vmem:[%s5 + $0x10] sm:$0xf]
      %v701 = vld [vmem:[%s5 + $0x14] sm:$0xf]
      %v702 = vld [vmem:[%s5 + $0x18] sm:$0xf]
      %v703 = vld [vmem:[%s5 + $0x1c] sm:$0xf]
      %v704 = vld [vmem:[%s5 + $0x20] sm:$0xf]
      %v705 = vld [vmem:[%s5 + $0x24] sm:$0xf]
      %v706 = vld [vmem:[%s5 + $0x28] sm:$0xf]
      %v707 = vld [vmem:[%s5 + $0x2c] sm:$0xf]
      %v708 = vld [vmem:[%s6] sm:$0x1]
      %v710 = vlaneseq
      %v711 = vshrl.u32 %v710, 7
      %v712 = vsub.s32 0, %v711
      %v713 = vrot.slane %v708, %v712
      %v727 = vunpack.c.l.b16 %v696
      %v728 = vunpack.c.l.b16 %v697
      %v729 = vunpack.c.l.b16 %v698
      %v730 = vunpack.c.l.b16 %v699
      %v731 = vunpack.c.l.b16 %v700
      %v732 = vunpack.c.l.b16 %v701
      %v733 = vunpack.c.l.b16 %v702
      %v734 = vunpack.c.l.b16 %v703
      %v735 = vunpack.c.l.b16 %v704
      %v736 = vunpack.c.l.b16 %v705
      %v737 = vunpack.c.l.b16 %v706
      %v738 = vunpack.c.l.b16 %v707
      %v739 = vpack.c.b16 %v728, %v727
      %v740 = vpack.c.b16 %v730, %v729
      %v741 = vpack.c.b16 %v732, %v731
      %v742 = vpack.c.b16 %v734, %v733
      %v743 = vpack.c.b16 %v736, %v735
      %v744 = vpack.c.b16 %v738, %v737
      %v752 = vsel %vm484, %v695, 0
      %754 = vmatprep.subr.bf16.mxu0 0
      %755 = vmatpush1.bf16.msra.mxu0 %v739
      %756 = vmatprep.subr.bf16.mxu0 0
      %757 = vmatpush1.bf16.msra.mxu0 %v740
      %758 = vmatprep.subr.bf16.mxu0 0
      %759 = vmatpush1.bf16.msra.mxu0 %v741
      %760 = vmatprep.subr.bf16.mxu0 0
      %761 = vmatpush1.bf16.msra.mxu0 %v742
      %762 = vmatprep.subr.bf16.mxu0 0
      %763 = vmatpush1.bf16.msra.mxu0 %v743
      %764 = vmatprep.subr.bf16.mxu0 0
      %765 = vmatpush1.bf16.msra.mxu0 %v744
      %766 = vmatprep.subr.bf16.mxu0 0
      %767 = vmatpush1.bf16.msra.mxu0 0
      %768 = vmatprep.subr.bf16.mxu0 0
      %769 = vmatpush1.bf16.msra.mxu0 0
      %770 = vmatprep.subr.bf16.mxu0 0
      %771 = vmatpush1.bf16.msra.mxu0 0
      %772 = vmatprep.subr.bf16.mxu0 0
      %773 = vmatpush1.bf16.msra.mxu0 0
      %774 = vmatprep.subr.bf16.mxu0 0
      %775 = vmatpush1.bf16.msra.mxu0 0
      %776 = vmatprep.subr.bf16.mxu0 0
      %777 = vmatpush1.bf16.msra.mxu0 0
      %778 = vmatprep.subr.bf16.mxu0 0
      %779 = vmatpush1.bf16.msra.mxu0 0
      %780 = vmatprep.subr.bf16.mxu0 0
      %781 = vmatpush1.bf16.msra.mxu0 0
      %782 = vmatprep.subr.bf16.mxu0 0
      %783 = vmatpush1.bf16.msra.mxu0 0
      %784 = vmatprep.subr.bf16.mxu0 0
      %785 = vmatpush1.bf16.msra.mxu0 0
      %786 = vmatprep.mubr.bf16.mxu0 0
      %787 = vmatmul.mubr.bf16.gmra.mrb[0].mxu0 %v752
      %v788 = vpop.f32.mrb[0].mxu0
      %v789 = vadd.f32 %v713, %v788
      %v790 = vpop.f32.mrb[0].mxu0
      %v791 = vpop.f32.mrb[0].mxu0
      %v792 = vadd.f32 %v713, %v791
      %v793 = vpop.f32.mrb[0].mxu0
      %794 = vdwg.mxu0
      %v795 = vmax.f32 %v789, 0.0
      %v796 = vmax.f32 %v792, 0.0
      %797 = vst.msk [vmem:[#allocation2 + $0x1] sm:$0xff] %vm390, %v795
      %798 = vst.msk [vmem:[#allocation2 + $0x9] sm:$0xff] %vm390, %v796
      %v799 = vld [vmem:[#allocation2] sm:$0xff]
      %v800 = vld [vmem:[#allocation2 + $0x8] sm:$0xff]
      %v801 = vld [vmem:[#allocation2 + $0x1] sm:$0xff]
      %v802 = vld [vmem:[#allocation2 + $0x9] sm:$0xff]
      %v803 = vld [vmem:[#allocation2 + $0x2] sm:$0xff]
      %v804 = vld [vmem:[#allocation2 + $0xa] sm:$0xff]
      %807 = vrot.lane.b32.xlu0 %v801, 32
      %v808 = vpop.permute.xlu0 %807
      %809 = vrot.lane.b32.xlu0 %v802, 32
      %v810 = vpop.permute.xlu0 %809
      %815 = vrot.lane.b32.xlu0 %v803, 64
      %v816 = vpop.permute.xlu0 %815
      %817 = vrot.lane.b32.xlu0 %v804, 64
      %v818 = vpop.permute.xlu0 %817
      %v821 = vsel %vm390, %v799, %v808
      %v822 = vsel %vm390, %v800, %v810
      %v823 = vsel %vm425, %v821, %v816
      %v824 = vsel %vm425, %v822, %v818
      %v825 = vpack.c.bf16 %v824, %v823
      %v826 = vld [vmem:[%s7] sm:$0xf]
      %v827 = vld [vmem:[%s7 + $0x4] sm:$0xf]
      %v828 = vld [vmem:[%s7 + $0x8] sm:$0xf]
      %v829 = vld [vmem:[%s7 + $0xc] sm:$0xf]
      %v830 = vld [vmem:[%s7 + $0x10] sm:$0xf]
      %v831 = vld [vmem:[%s7 + $0x14] sm:$0xf]
      %v832 = vld [vmem:[%s7 + $0x18] sm:$0xf]
      %v833 = vld [vmem:[%s7 + $0x1c] sm:$0xf]
      %v834 = vld [vmem:[%s7 + $0x20] sm:$0xf]
      %v835 = vld [vmem:[%s7 + $0x24] sm:$0xf]
      %v836 = vld [vmem:[%s7 + $0x28] sm:$0xf]
      %v837 = vld [vmem:[%s7 + $0x2c] sm:$0xf]
      %v838 = vld [vmem:[#allocation3] sm:$0x1]
      %v840 = vlaneseq
      %v841 = vshrl.u32 %v840, 7
      %v842 = vsub.s32 0, %v841
      %v843 = vrot.slane %v838, %v842
      %v857 = vunpack.c.l.b16 %v826
      %v858 = vunpack.c.l.b16 %v827
      %v859 = vunpack.c.l.b16 %v828
      %v860 = vunpack.c.l.b16 %v829
      %v861 = vunpack.c.l.b16 %v830
      %v862 = vunpack.c.l.b16 %v831
      %v863 = vunpack.c.l.b16 %v832
      %v864 = vunpack.c.l.b16 %v833
      %v865 = vunpack.c.l.b16 %v834
      %v866 = vunpack.c.l.b16 %v835
      %v867 = vunpack.c.l.b16 %v836
      %v868 = vunpack.c.l.b16 %v837
      %v869 = vpack.c.b16 %v858, %v857
      %v870 = vpack.c.b16 %v860, %v859
      %v871 = vpack.c.b16 %v862, %v861
      %v872 = vpack.c.b16 %v864, %v863
      %v873 = vpack.c.b16 %v866, %v865
      %v874 = vpack.c.b16 %v868, %v867
      %v882 = vsel %vm484, %v825, 0
      %884 = vmatprep.subr.bf16.mxu0 0
      %885 = vmatpush1.bf16.msra.mxu0 %v869
      %886 = vmatprep.subr.bf16.mxu0 0
      %887 = vmatpush1.bf16.msra.mxu0 %v870
      %888 = vmatprep.subr.bf16.mxu0 0
      %889 = vmatpush1.bf16.msra.mxu0 %v871
      %890 = vmatprep.subr.bf16.mxu0 0
      %891 = vmatpush1.bf16.msra.mxu0 %v872
      %892 = vmatprep.subr.bf16.mxu0 0
      %893 = vmatpush1.bf16.msra.mxu0 %v873
      %894 = vmatprep.subr.bf16.mxu0 0
      %895 = vmatpush1.bf16.msra.mxu0 %v874
      %896 = vmatprep.subr.bf16.mxu0 0
      %897 = vmatpush1.bf16.msra.mxu0 0
      %898 = vmatprep.subr.bf16.mxu0 0
      %899 = vmatpush1.bf16.msra.mxu0 0
      %900 = vmatprep.subr.bf16.mxu0 0
      %901 = vmatpush1.bf16.msra.mxu0 0
      %902 = vmatprep.subr.bf16.mxu0 0
      %903 = vmatpush1.bf16.msra.mxu0 0
      %904 = vmatprep.subr.bf16.mxu0 0
      %905 = vmatpush1.bf16.msra.mxu0 0
      %906 = vmatprep.subr.bf16.mxu0 0
      %907 = vmatpush1.bf16.msra.mxu0 0
      %908 = vmatprep.subr.bf16.mxu0 0
      %909 = vmatpush1.bf16.msra.mxu0 0
      %910 = vmatprep.subr.bf16.mxu0 0
      %911 = vmatpush1.bf16.msra.mxu0 0
      %912 = vmatprep.subr.bf16.mxu0 0
      %913 = vmatpush1.bf16.msra.mxu0 0
      %914 = vmatprep.subr.bf16.mxu0 0
      %915 = vmatpush1.bf16.msra.mxu0 0
      %916 = vmatprep.mubr.bf16.mxu0 0
      %917 = vmatmul.mubr.bf16.gmra.mrb[0].mxu0 %v882
      %v918 = vpop.f32.mrb[0].mxu0
      %v919 = vadd.f32 %v843, %v918
      %v920 = vpop.f32.mrb[0].mxu0
      %v921 = vpop.f32.mrb[0].mxu0
      %v922 = vadd.f32 %v843, %v921
      %v923 = vpop.f32.mrb[0].mxu0
      %924 = vdwg.mxu0
      %925 = vrot.lane.b32.xlu0 %v529, 64
      %v926 = vpop.permute.xlu0 %925
      %927 = vrot.lane.b32.xlu0 %v530, 64
      %v928 = vpop.permute.xlu0 %927
      %931 = vst.msk [vmem:[#allocation2 + $0x1] sm:$0xff] %vm390, %v926
      %932 = vst.msk [vmem:[#allocation2 + $0x9] sm:$0xff] %vm390, %v928
      %v933 = vld [vmem:[#allocation2] sm:$0xff]
      %v934 = vld [vmem:[#allocation2 + $0x8] sm:$0xff]
      %v935 = vld [vmem:[#allocation2 + $0x1] sm:$0xff]
      %v936 = vld [vmem:[#allocation2 + $0x9] sm:$0xff]
      %v937 = vld [vmem:[#allocation2 + $0x2] sm:$0xff]
      %v938 = vld [vmem:[#allocation2 + $0xa] sm:$0xff]
      %941 = vrot.lane.b32.xlu0 %v935, 32
      %v942 = vpop.permute.xlu0 %941
      %943 = vrot.lane.b32.xlu0 %v936, 32
      %v944 = vpop.permute.xlu0 %943
      %949 = vrot.lane.b32.xlu0 %v937, 64
      %v950 = vpop.permute.xlu0 %949
      %951 = vrot.lane.b32.xlu0 %v938, 64
      %v952 = vpop.permute.xlu0 %951
      %v955 = vsel %vm390, %v933, %v942
      %v956 = vsel %vm390, %v934, %v944
      %v957 = vsel %vm425, %v955, %v950
      %v958 = vsel %vm425, %v956, %v952
      %v959 = vpack.c.bf16 %v958, %v957
      %v960 = vld [vmem:[%s9] sm:$0xf]
      %v961 = vld [vmem:[%s9 + $0x4] sm:$0xf]
      %v962 = vld [vmem:[%s9 + $0x8] sm:$0xf]
      %v963 = vld [vmem:[%s9 + $0xc] sm:$0xf]
      %v964 = vld [vmem:[%s9 + $0x10] sm:$0xf]
      %v965 = vld [vmem:[%s9 + $0x14] sm:$0xf]
      %v966 = vld [vmem:[%s9 + $0x18] sm:$0xf]
      %v967 = vld [vmem:[%s9 + $0x1c] sm:$0xf]
      %v968 = vld [vmem:[%s9 + $0x20] sm:$0xf]
      %v969 = vld [vmem:[%s9 + $0x24] sm:$0xf]
      %v970 = vld [vmem:[%s9 + $0x28] sm:$0xf]
      %v971 = vld [vmem:[%s9 + $0x2c] sm:$0xf]
      %v972 = vld [vmem:[%s10] sm:$0x1]
      %v974 = vlaneseq
      %v975 = vshrl.u32 %v974, 7
      %v976 = vsub.s32 0, %v975
      %v977 = vrot.slane %v972, %v976
      %v991 = vunpack.c.l.b16 %v960
      %v992 = vunpack.c.l.b16 %v961
      %v993 = vunpack.c.l.b16 %v962
      %v994 = vunpack.c.l.b16 %v963
      %v995 = vunpack.c.l.b16 %v964
      %v996 = vunpack.c.l.b16 %v965
      %v997 = vunpack.c.l.b16 %v966
      %v998 = vunpack.c.l.b16 %v967
      %v999 = vunpack.c.l.b16 %v968
      %v1000 = vunpack.c.l.b16 %v969
      %v1001 = vunpack.c.l.b16 %v970
      %v1002 = vunpack.c.l.b16 %v971
      %v1003 = vpack.c.b16 %v992, %v991
      %v1004 = vpack.c.b16 %v994, %v993
      %v1005 = vpack.c.b16 %v996, %v995
      %v1006 = vpack.c.b16 %v998, %v997
      %v1007 = vpack.c.b16 %v1000, %v999
      %v1008 = vpack.c.b16 %v1002, %v1001
      %v1016 = vsel %vm484, %v959, 0
      %1018 = vmatprep.subr.bf16.mxu0 0
      %1019 = vmatpush1.bf16.msra.mxu0 %v1003
      %1020 = vmatprep.subr.bf16.mxu0 0
      %1021 = vmatpush1.bf16.msra.mxu0 %v1004
      %1022 = vmatprep.subr.bf16.mxu0 0
      %1023 = vmatpush1.bf16.msra.mxu0 %v1005
      %1024 = vmatprep.subr.bf16.mxu0 0
      %1025 = vmatpush1.bf16.msra.mxu0 %v1006
      %1026 = vmatprep.subr.bf16.mxu0 0
      %1027 = vmatpush1.bf16.msra.mxu0 %v1007
      %1028 = vmatprep.subr.bf16.mxu0 0
      %1029 = vmatpush1.bf16.msra.mxu0 %v1008
      %1030 = vmatprep.subr.bf16.mxu0 0
      %1031 = vmatpush1.bf16.msra.mxu0 0
      %1032 = vmatprep.subr.bf16.mxu0 0
      %1033 = vmatpush1.bf16.msra.mxu0 0
      %1034 = vmatprep.subr.bf16.mxu0 0
      %1035 = vmatpush1.bf16.msra.mxu0 0
      %1036 = vmatprep.subr.bf16.mxu0 0
      %1037 = vmatpush1.bf16.msra.mxu0 0
      %1038 = vmatprep.subr.bf16.mxu0 0
      %1039 = vmatpush1.bf16.msra.mxu0 0
      %1040 = vmatprep.subr.bf16.mxu0 0
      %1041 = vmatpush1.bf16.msra.mxu0 0
      %1042 = vmatprep.subr.bf16.mxu0 0
      %1043 = vmatpush1.bf16.msra.mxu0 0
      %1044 = vmatprep.subr.bf16.mxu0 0
      %1045 = vmatpush1.bf16.msra.mxu0 0
      %1046 = vmatprep.subr.bf16.mxu0 0
      %1047 = vmatpush1.bf16.msra.mxu0 0
      %1048 = vmatprep.subr.bf16.mxu0 0
      %1049 = vmatpush1.bf16.msra.mxu0 0
      %1050 = vmatprep.mubr.bf16.mxu0 0
      %1051 = vmatmul.mubr.bf16.gmra.mrb[0].mxu0 %v1016
      %v1052 = vpop.f32.mrb[0].mxu0
      %v1053 = vadd.f32 %v977, %v1052
      %v1054 = vpop.f32.mrb[0].mxu0
      %v1055 = vpop.f32.mrb[0].mxu0
      %v1056 = vadd.f32 %v977, %v1055
      %v1057 = vpop.f32.mrb[0].mxu0
      %1058 = vdwg.mxu0
      %1061 = vrot.lane.b32.xlu0 %v919, 2
      %v1062 = vpop.permute.xlu0 %1061
      %1063 = vrot.lane.b32.xlu0 %v922, 2
      %v1064 = vpop.permute.xlu0 %1063
      %1069 = vrot.lane.b32.xlu0 %v1053, 3
      %v1070 = vpop.permute.xlu0 %1069
      %1071 = vrot.lane.b32.xlu0 %v1056, 3
      %v1072 = vpop.permute.xlu0 %1071
      %vm1075 = vcmask 15360
      %v1076 = vsel %vm1075, %v653, %v1062
      %v1077 = vsel %vm1075, %v656, %v1064
      %vm1078 = vcmask 23552
      %v1079 = vsel %vm1078, %v1076, %v1070
      %v1080 = vsel %vm1078, %v1077, %v1072
      %vm1081 = vcmask 48128
      %1082 = vst.msk [vmem:[%s388] sm:$0xff] %vm1081, %v1079
      %1083 = vst.msk [vmem:[%s388 + $0x8] sm:$0xff] %vm1081, %v1080
      %p1084 = scmp.lt.s32.totalorder %s24, 1
      %s1085 = scalar_select %p1084, %s24, 1
      %s1086 = smul.addr %s1085, 2
      %s1087 = smul.addr %s1086, 8
      %s1088 = scalar_lea.vmem %s11, %s1087
      // Predicated region
      $region65: #{tpu_custom_call.1} parent=63 // pred_check
        %p1089 = pneg %p278
      $region66: #{tpu_custom_call.1} parent=63 // pred_check_branch
        %1091 = sbr.rel (%p1089) target = $region68
      $region67: #{tpu_custom_call.1} parent=63 // pred_region
        _
      $region68: #{tpu_custom_call.1} parent=63 // pred_fallthru
        _
    $region64: #{tpu_custom_call.1} parent=5 // pred_fallthru
      _
    %p1092 = scmp.le.s32.totalorder 2, %s19
    // Predicated region
    $region69: #{tpu_custom_call.1} parent=5 // pred_check
      %p1093 = pneg %p1092
    $region70: #{tpu_custom_call.1} parent=5 // pred_check_branch
      %1095 = sbr.rel (%p1093) target = $region72
    $region71: #{tpu_custom_call.1} parent=5 // pred_region
      %s1096 = ssub.s32 %s19, 2
      // Predicated region
      $region73: #{tpu_custom_call.1} parent=71 // pred_check
        %p1097 = pneg %p284
      $region74: #{tpu_custom_call.1} parent=71 // pred_check_branch
        %1099 = sbr.rel (%p1097) target = $region76
      $region75: #{tpu_custom_call.1} parent=71 // pred_region
        %p1100 = scmp.lt.s32.totalorder %s25, 1
        %s1101 = scalar_select %p1100, %s25, 1
        %s1102 = smul.addr %s1101, 2
        %s1103 = smul.addr %s1102, 8
        %s1104 = scalar_lea.vmem %s11, %s1103
      $region76: #{tpu_custom_call.1} parent=71 // pred_fallthru
        _
    $region72: #{tpu_custom_call.1} parent=5 // pred_fallthru
      _
  $region6: #{tpu_custom_call.1} parent=0 // loop_footer
    %s23 = sadd.s32 1, %s19
  $region7: #{tpu_custom_call.1} parent=0 // loop_footer_branch
    %18 = sbr.rel target = $region3
  $region8: #{tpu_custom_call.1} parent=0 // loop_exit
    _

</llo_original>
